<compile_context>
chip_gen: v5e
topology: v5e:2x2
jax: 0.10.0
libtpu: 0.0.40
codegen_flags: <defaults>
</compile_context>

<pallas_src>
import functools

import jax
import jax.numpy as jnp
from jax.experimental import pallas as pl
from jax.experimental.pallas import tpu as pltpu


def _ncl_gcn_kernel(adj_ref, ego_hbm, layers_ref, mean_ref,
                    cur_ref, nxt_ref, acc_ref,
                    *, n_layers, tm, compute_dtype):
    """One grid step == one (layer, row-block) of the LightGCN propagation.

    adj_ref    : (tm, N)     streamed row slab of the normalized adjacency
    ego_hbm    : (N, Dp)     layer-0 embeddings, raw HBM ref (copied once)
    layers_ref : (1, tm, Dp) output slot: this layer's embedding rows
    mean_ref   : (tm, Dp)    output slot: rows of the LightGCN mean
    cur_ref    : (N, Dp) f32 scratch, e_l (full, carried across the grid)
    nxt_ref    : (N, Dp) f32 scratch, e_{l+1} assembled row-block by row-block
    acc_ref    : (N, Dp) f32 scratch, running sum of embeddings_list[: n_layers+1]
    """
    l = pl.program_id(0)
    i = pl.program_id(1)
    last_l = pl.num_programs(0) - 1
    last_i = pl.num_programs(1) - 1

    @pl.when(jnp.logical_and(l == 0, i == 0))
    def _():
        # One-time copy of the grid-invariant ego embeddings into VMEM.
        pltpu.sync_copy(ego_hbm, cur_ref)
        acc_ref[...] = cur_ref[...]          # e_0 always participates in the mean

    # rows[row : row+tm] of e_{l+1} = norm_adj[row : row+tm, :] @ e_l   (MXU, f32 acc)
    row = pl.multiple_of(i * tm, tm)
    new_rows = jnp.dot(adj_ref[...],
                       cur_ref[...].astype(compute_dtype),
                       preferred_element_type=jnp.float32)
    nxt_ref[pl.ds(row, tm), :] = new_rows
    layers_ref[0, :, :] = new_rows.astype(layers_ref.dtype)

    # Only embeddings_list[1 .. n_layers] enter the LightGCN mean (the grid may
    # run longer than n_layers when hyper_layers*2 > n_layers).
    @pl.when(l < n_layers)
    def _():
        acc_ref[pl.ds(row, tm), :] = acc_ref[pl.ds(row, tm), :] + new_rows

    # Fully (re)write the mean block on every visit so the revisited output
    # buffer is never written back uninitialized; the visit at l == L-1 leaves
    # the correct final mean in HBM.
    inv = jnp.float32(1.0 / (n_layers + 1))
    mean_ref[...] = (acc_ref[pl.ds(row, tm), :] * inv).astype(mean_ref.dtype)

    # At the end of a layer, the assembled e_{l+1} becomes e_l for the next one.
    @pl.when(jnp.logical_and(i == last_i, l < last_l))
    def _():
        cur_ref[...] = nxt_ref[...]


def _pick_row_tile(n):
    """Largest row-tile (multiple of 128 preferred) that divides N."""
    for cand in (512, 256, 128):
        if n % cand == 0:
            return cand
    return n  # fall back to a single row block (full-extent block is always legal)


def ncl_forward(norm_adj, ego_embeddings, *, n_drugs, n_diseases,
                n_layers, hyper_layers, matmul_dtype=jnp.bfloat16):
    """Pallas implementation of NCL.forward(norm_adj).

    Returns (drug_all_embeddings, disease_all_embeddings, embeddings_list)
    exactly like the PyTorch module.
    """
    N, D = ego_embeddings.shape
    assert N == n_drugs + n_diseases
    L = max(n_layers, hyper_layers * 2)

    # Lane-dense layout: pad the embedding dim to a multiple of 128.  The
    # contraction dim is N, so padded columns stay exactly zero.
    Dp = max(128, ((D + 127) // 128) * 128)
    ego_p = ego_embeddings.astype(jnp.float32)
    if Dp != D:
        ego_p = jnp.pad(ego_p, ((0, 0), (0, Dp - D)))

    adj = norm_adj.astype(matmul_dtype)     # halves HBM traffic of the N^2 operand
    tm = _pick_row_tile(N)
    n_rb = N // tm

    # VMEM budget (streamed adj slabs + carries + output blocks), with headroom;
    # cap at 64 MiB so the request is valid on v7x as well as v5e/v6e.
    adj_item = jnp.dtype(matmul_dtype).itemsize
    est = (2 * tm * N * adj_item            # adjacency slabs, double-buffered
           + 3 * N * Dp * 4                 # cur / nxt / acc scratch
           + 2 * 2 * tm * Dp * 4)           # layer + mean output blocks, 2-buffered
    vmem_limit = int(min(64 * 2**20, max(32 * 2**20, 2 * est)))

    out_layers, out_mean = pl.pallas_call(
        functools.partial(_ncl_gcn_kernel, n_layers=n_layers, tm=tm,
                          compute_dtype=matmul_dtype),
        out_shape=(jax.ShapeDtypeStruct((L, N, Dp), jnp.float32),
                   jax.ShapeDtypeStruct((N, Dp), jnp.float32)),
        grid_spec=pltpu.PrefetchScalarGridSpec(
            num_scalar_prefetch=0,
            grid=(L, n_rb),                                  # layers outer, row blocks inner
            in_specs=[
                pl.BlockSpec((tm, N), lambda l, i: (i, 0)),  # streamed adjacency slab
                pl.BlockSpec(memory_space=pl.ANY),           # ego embeddings (copied once)
            ],
            out_specs=[
                pl.BlockSpec((1, tm, Dp), lambda l, i: (l, i, 0)),  # per-layer rows
                pl.BlockSpec((tm, Dp), lambda l, i: (i, 0)),        # LightGCN mean rows
            ],
            scratch_shapes=[
                pltpu.VMEM((N, Dp), jnp.float32),   # cur  (e_l)
                pltpu.VMEM((N, Dp), jnp.float32),   # nxt  (e_{l+1})
                pltpu.VMEM((N, Dp), jnp.float32),   # mean accumulator
            ]),
        compiler_params=pltpu.CompilerParams(
            dimension_semantics=("arbitrary", "arbitrary"),
            vmem_limit_bytes=vmem_limit),
    )(adj, ego_p)

    embeddings_list = [ego_embeddings.astype(jnp.float32)] + [
        out_layers[i, :, :D] for i in range(L)]
    drug_all_embeddings = out_mean[:n_drugs, :D]
    disease_all_embeddings = out_mean[n_drugs:, :D]
    return drug_all_embeddings, disease_all_embeddings, embeddings_list


# ------------------------- parameter / input setup -------------------------

def xavier_uniform(key, shape):
    fan_in, fan_out = shape[0], shape[1]
    bound = (6.0 / (fan_in + fan_out)) ** 0.5
    return jax.random.uniform(key, shape, jnp.float32, -bound, bound)


def get_norm_adj_mat(drug_disease_matrix):
    """Dense equivalent of NCL.get_norm_adj_mat (D^-1/2 A D^-1/2)."""
    n_drugs, n_diseases = drug_disease_matrix.shape
    N = n_drugs + n_diseases
    A = jnp.zeros((N, N), jnp.float32)
    A = A.at[:n_drugs, n_drugs:].set(drug_disease_matrix)
    A = A.at[n_drugs:, :n_drugs].set(drug_disease_matrix.T)
    deg = (A > 0).sum(axis=1).astype(jnp.float32) + 1e-7
    dinv = deg ** -0.5
    return dinv[:, None] * A * dinv[None, :]


def reference_forward(norm_adj, ego, n_drugs, n_layers, hyper_layers,
                      matmul_dtype=jnp.float32):
    """Pure-jnp reference mirroring the PyTorch forward (optionally with the
    same reduced-precision matmul operands the kernel uses)."""
    adj = norm_adj.astype(matmul_dtype)
    all_e = ego.astype(jnp.float32)
    emb_list = [all_e]
    for _ in range(max(n_layers, hyper_layers * 2)):
        all_e = jnp.dot(adj, all_e.astype(matmul_dtype),
                        preferred_element_type=jnp.float32)
        emb_list.append(all_e)
    stacked = jnp.stack(emb_list[:n_layers + 1], axis=1)
    mean_e = jnp.mean(stacked, axis=1)
    return mean_e[:n_drugs], mean_e[n_drugs:], emb_list


if __name__ == "__main__":
    # Small, deterministic synthetic configuration.
    n_drugs, n_diseases = 64, 64          # N = 128
    embedding_dim = 32
    n_layers = 2
    hyper_layers = 1                       # forward runs max(2, 2) = 2 layers

    key = jax.random.PRNGKey(0)
    k_dd, k_drug, k_dis = jax.random.split(key, 3)

    # Synthetic binary drug-disease interaction matrix.
    drug_disease_matrix = (
        jax.random.uniform(k_dd, (n_drugs, n_diseases)) < 0.1
    ).astype(jnp.float32)

    # Deterministic xavier-uniform embedding tables (as in the module __init__).
    drug_embedding = xavier_uniform(k_drug, (n_drugs, embedding_dim))
    disease_embedding = xavier_uniform(k_dis, (n_diseases, embedding_dim))
    ego_embeddings = jnp.concatenate([drug_embedding, disease_embedding], axis=0)

    norm_adj = get_norm_adj_mat(drug_disease_matrix)

    drug_all, disease_all, emb_list = ncl_forward(
        norm_adj, ego_embeddings,
        n_drugs=n_drugs, n_diseases=n_diseases,
        n_layers=n_layers, hyper_layers=hyper_layers,
        matmul_dtype=jnp.bfloat16)
    jax.block_until_ready((drug_all, disease_all, emb_list))

    # Tight check against a reference using the same bf16 matmul operands
    # (f32 accumulation in both paths).
    ref_drug_m, ref_dis_m, ref_list_m = reference_forward(
        norm_adj, ego_embeddings, n_drugs, n_layers, hyper_layers,
        matmul_dtype=jnp.bfloat16)
    assert jnp.allclose(drug_all, ref_drug_m, atol=1e-4)
    assert jnp.allclose(disease_all, ref_dis_m, atol=1e-4)
    for a, b in zip(emb_list, ref_list_m):
        assert jnp.allclose(a, b, atol=1e-4)

    # Looser check against the exact f32 semantics of the PyTorch module
    # (only difference is the bf16 cast of the adjacency / matmul operands).
    ref_drug, ref_dis, _ = reference_forward(
        norm_adj, ego_embeddings, n_drugs, n_layers, hyper_layers,
        matmul_dtype=jnp.float32)
    assert jnp.allclose(drug_all, ref_drug, atol=1e-2)
    assert jnp.allclose(disease_all, ref_dis, atol=1e-2)

    print("KERNEL_OK")
</pallas_src>

<mosaic_0001>
module attributes {stable_mosaic.version = 11 : i64} {
  func.func @_ncl_gcn_kernel(%arg0: i32, %arg1: i32, %arg2: memref<128x128xbf16, #tpu.memory_space<vmem>>, %arg3: memref<128x128xf32, #tpu.memory_space<any>>, %arg4: memref<1x128x128xf32, #tpu.memory_space<vmem>>, %arg5: memref<128x128xf32, #tpu.memory_space<vmem>>, %arg6: memref<128x128xf32, #tpu.memory_space<vmem>>, %arg7: memref<128x128xf32, #tpu.memory_space<vmem>>, %arg8: memref<128x128xf32, #tpu.memory_space<vmem>>) attributes {dimension_semantics = [#tpu.dimension_semantics<arbitrary>, #tpu.dimension_semantics<arbitrary>], iteration_bounds = array<i64: 2, 1>, scalar_prefetch = 0 : i64, scratch_operands = 3 : i64, tpu.core_type = #tpu.core_type<tc>, window_params = [{transform_indices = @transform_0, window_bounds = array<i64: 128, 128>}, {}, {transform_indices = @transform_2, window_bounds = array<i64: 1, 128, 128>}, {transform_indices = @transform_3, window_bounds = array<i64: 128, 128>}]} {
    %c0_i32 = arith.constant 0 : i32
    %0 = arith.cmpi eq, %arg0, %c0_i32 : i32
    %c0_i32_0 = arith.constant 0 : i32
    %1 = arith.cmpi eq, %arg1, %c0_i32_0 : i32
    %2 = arith.andi %0, %1 : i1
    %3 = arith.extui %2 : i1 to i32
    %c0_i32_1 = arith.constant 0 : i32
    %4 = arith.cmpi ne, %3, %c0_i32_1 : i32
    scf.if %4 {
      "tpu.region"() ({
        %31 = tpu.sem_alloc : memref<!tpu.dma_semaphore, #tpu.memory_space<semaphore_mem>>
        tpu.enqueue_dma source(%arg3 : memref<128x128xf32, #tpu.memory_space<any>>) target(%arg6 : memref<128x128xf32, #tpu.memory_space<vmem>>) target_semaphore(%31 : memref<!tpu.dma_semaphore, #tpu.memory_space<semaphore_mem>>)
        tpu.wait_dma2 semaphore(%31 : memref<!tpu.dma_semaphore, #tpu.memory_space<semaphore_mem>>) src(%arg3 : memref<128x128xf32, #tpu.memory_space<any>>) dst(%arg6 : memref<128x128xf32, #tpu.memory_space<vmem>>)
        tpu.yield
      }) : () -> ()
      %c0_16 = arith.constant 0 : index
      %c0_17 = arith.constant 0 : index
      %29 = vector.load %arg6[%c0_16, %c0_17] : memref<128x128xf32, #tpu.memory_space<vmem>>, vector<128x128xf32>
      %c0_18 = arith.constant 0 : index
      %c0_19 = arith.constant 0 : index
      %30 = vector.load %arg8[%c0_18, %c0_19] : memref<128x128xf32, #tpu.memory_space<vmem>>, vector<128x128xf32>
      tpu.vector_store %arg8[%c0_18, %c0_19], %29 {strides = array<i32>} : memref<128x128xf32, #tpu.memory_space<vmem>>, vector<128x128xf32>,
    } else {
    }
    %c128_i32 = arith.constant 128 : i32
    %5 = arith.muli %arg1, %c128_i32 : i32
    %6 = tpu.assume_multiple %5, 128 : i32
    %c0 = arith.constant 0 : index
    %c0_2 = arith.constant 0 : index
    %7 = vector.load %arg2[%c0, %c0_2] : memref<128x128xbf16, #tpu.memory_space<vmem>>, vector<128x128xbf16>
    %c0_3 = arith.constant 0 : index
    %c0_4 = arith.constant 0 : index
    %8 = vector.load %arg6[%c0_3, %c0_4] : memref<128x128xf32, #tpu.memory_space<vmem>>, vector<128x128xf32>
    %9 = arith.truncf %8 : vector<128x128xf32> to vector<128x128xbf16>
    %cst = arith.constant dense<0.000000e+00> : vector<128x128xf32>
    %10 = tpu.matmul %7, %9, %cst {dimension_numbers = #tpu.dot_dimension_numbers<[1], [0], [0], [1], [0, 0, 1, 1], [], []>} : vector<128x128xbf16>, vector<128x128xbf16>, vector<128x128xf32> -> vector<128x128xf32>
    %11 = arith.index_cast %6 : i32 to index
    %c0_5 = arith.constant 0 : index
    %12 = vector.load %arg7[%11, %c0_5] : memref<128x128xf32, #tpu.memory_space<vmem>>, vector<128x128xf32>
    tpu.vector_store %arg7[%11, %c0_5], %10 {strides = array<i32>} : memref<128x128xf32, #tpu.memory_space<vmem>>, vector<128x128xf32>,
    %c0_6 = arith.constant 0 : index
    %c0_7 = arith.constant 0 : index
    %c0_8 = arith.constant 0 : index
    %13 = vector.load %arg4[%c0_6, %c0_7, %c0_8] : memref<1x128x128xf32, #tpu.memory_space<vmem>>, vector<1x128x128xf32>
    %14 = vector.shape_cast %13 : vector<1x128x128xf32> to vector<128x128xf32>
    %15 = vector.shape_cast %10 : vector<128x128xf32> to vector<1x128x128xf32>
    tpu.vector_store %arg4[%c0_6, %c0_7, %c0_8], %15 {strides = array<i32>} : memref<1x128x128xf32, #tpu.memory_space<vmem>>, vector<1x128x128xf32>,
    %c2_i32 = arith.constant 2 : i32
    %16 = arith.cmpi slt, %arg0, %c2_i32 : i32
    %17 = arith.extui %16 : i1 to i32
    %c0_i32_9 = arith.constant 0 : i32
    %18 = arith.cmpi ne, %17, %c0_i32_9 : i32
    scf.if %18 {
      %29 = arith.index_cast %6 : i32 to index
      %c0_16 = arith.constant 0 : index
      %30 = vector.load %arg8[%29, %c0_16] : memref<128x128xf32, #tpu.memory_space<vmem>>, vector<128x128xf32>
      %31 = arith.addf %30, %10 : vector<128x128xf32>
      %32 = arith.index_cast %6 : i32 to index
      %c0_17 = arith.constant 0 : index
      %33 = vector.load %arg8[%32, %c0_17] : memref<128x128xf32, #tpu.memory_space<vmem>>, vector<128x128xf32>
      tpu.vector_store %arg8[%32, %c0_17], %31 {strides = array<i32>} : memref<128x128xf32, #tpu.memory_space<vmem>>, vector<128x128xf32>,
    } else {
    }
    %19 = arith.index_cast %6 : i32 to index
    %c0_10 = arith.constant 0 : index
    %20 = vector.load %arg8[%19, %c0_10] : memref<128x128xf32, #tpu.memory_space<vmem>>, vector<128x128xf32>
    %cst_11 = arith.constant 0.333333343 : f32
    %21 = vector.broadcast %cst_11 : f32 to vector<128x128xf32>
    %22 = arith.mulf %20, %21 : vector<128x128xf32>
    %c0_12 = arith.constant 0 : index
    %c0_13 = arith.constant 0 : index
    %23 = vector.load %arg5[%c0_12, %c0_13] : memref<128x128xf32, #tpu.memory_space<vmem>>, vector<128x128xf32>
    tpu.vector_store %arg5[%c0_12, %c0_13], %22 {strides = array<i32>} : memref<128x128xf32, #tpu.memory_space<vmem>>, vector<128x128xf32>,
    %c0_i32_14 = arith.constant 0 : i32
    %24 = arith.cmpi eq, %arg1, %c0_i32_14 : i32
    %c1_i32 = arith.constant 1 : i32
    %25 = arith.cmpi slt, %arg0, %c1_i32 : i32
    %26 = arith.andi %24, %25 : i1
    %27 = arith.extui %26 : i1 to i32
    %c0_i32_15 = arith.constant 0 : i32
    %28 = arith.cmpi ne, %27, %c0_i32_15 : i32
    scf.if %28 {
      %c0_16 = arith.constant 0 : index
      %c0_17 = arith.constant 0 : index
      %29 = vector.load %arg7[%c0_16, %c0_17] : memref<128x128xf32, #tpu.memory_space<vmem>>, vector<128x128xf32>
      %c0_18 = arith.constant 0 : index
      %c0_19 = arith.constant 0 : index
      %30 = vector.load %arg6[%c0_18, %c0_19] : memref<128x128xf32, #tpu.memory_space<vmem>>, vector<128x128xf32>
      tpu.vector_store %arg6[%c0_18, %c0_19], %29 {strides = array<i32>} : memref<128x128xf32, #tpu.memory_space<vmem>>, vector<128x128xf32>,
    } else {
    }
    return
  }
  func.func @transform_0(%arg0: i32, %arg1: i32) -> (i32, i32) {
    %c0_i32 = arith.constant 0 : i32
    %c0_i32_0 = arith.constant 0 : i32
    return %arg1, %c0_i32 : i32, i32
  }
  func.func @transform_2(%arg0: i32, %arg1: i32) -> (i32, i32, i32) {
    %c0_i32 = arith.constant 0 : i32
    %c0_i32_0 = arith.constant 0 : i32
    return %arg0, %arg1, %c0_i32 : i32, i32, i32
  }
  func.func @transform_3(%arg0: i32, %arg1: i32) -> (i32, i32) {
    %c0_i32 = arith.constant 0 : i32
    %c0_i32_0 = arith.constant 0 : i32
    return %arg1, %c0_i32 : i32, i32
  }
}

</mosaic_0001>

<llo_original>
// kernel: tpu_custom_call.1
$region0: #{tpu_custom_call.1}
  #allocation0 [shape = 'u32[]', space=smem, size = 0x4, offset = 0x4, fixed_abs, tag = 'smem constant byte address 0x4 - core index']
  #allocation1 [shape = 'u32[72,128]{1,0:T(1,128)}', space=vmem, size = 0x9000, scoped, tag = 'internal scratch']
  #allocation2 [shape = 'f32[128,128]{1,0:T(8,128)}', space=vmem, size = 0x10000, scoped, tag = 'scratch operand']
  #allocation3 [shape = 'f32[128,128]{1,0:T(8,128)}', space=vmem, size = 0x10000, scoped, tag = 'scratch operand']
  #allocation4 [shape = 'f32[128,128]{1,0:T(8,128)}', space=vmem, size = 0x10000, scoped, tag = 'scratch operand']
  #allocation12 [shape = 's32[]', space=sflag, size = 0x4, offset = 0, fixed_abs, tag = 'sflag constant byte address 0x0 - dummy sync flag']
  #allocation13 [shape = 's32[]', space=sflag, size = 0x4, offset = 0, fixed_abs, tag = 'sflag constant byte address 0x0 - dummy sync flag']
  #allocation14 [shape = 'u32[]', space=smem, size = 0x4, offset = 0x44, fixed_abs, tag = 'smem constant byte address 0x44 - assertion arg 0']
  #allocation15 [shape = 'u32[]', space=smem, size = 0x4, offset = 0x48, fixed_abs, tag = 'smem constant byte address 0x48 - assertion arg 1']
  %s0 = inlined_call_operand.hbm [shape: bf16[128,128], index: 0, kind: input, shape index: {}]
  %s1 = inlined_call_operand.hbm [shape: f32[128,128], index: 1, kind: input, shape index: {}]
  %s2 = inlined_call_operand.hbm [shape: f32[2,128,128], index: 2, kind: output, shape index: {0}]
  %s3 = inlined_call_operand.hbm [shape: f32[128,128], index: 3, kind: output, shape index: {1}]
  %4 = xla_tuple %s2, %s3
  %s5 = sld [smem:[#allocation0]]
  $region66: #{tpu_custom_call.1} parent=0
    _
  %s7 = ssub.s32 1, %s5
  %s8 = scalar_select 0, %s7, %s5
  $region1: #{tpu_custom_call.1} parent=0
    #allocation5 [shape = 'u8[32768]{0}', space=vmem, size = 0x8000, scoped, tag = 'input window, operand 0, single buffered']
    #allocation6 [shape = 's32[2]{0}', space=sflag, size = 0x8, scoped, tag = 'scoped memory for tpu_custom_call.1']
    #allocation7 [shape = 's32[2]{0}', space=sflag, size = 0x8, scoped, tag = 'scoped memory for tpu_custom_call.1']
    #allocation8 [shape = 'u8[131072]{0}', space=vmem, size = 0x20000, scoped, tag = 'output window, operand 0']
    #allocation9 [shape = 'u8[65536]{0}', space=vmem, size = 0x10000, scoped, tag = 'output window, operand 1, single buffered']
    #allocation10 [shape = 's32[1]{0}', space=sflag, size = 0x4, scoped, tag = 'scoped memory for tpu_custom_call.1']
    %9 = vsyncpa [#allocation6], 0
    %10 = vsyncpa [#allocation7], 0
    %s11 = scalar_lea.sflag [#allocation7], 1
    %12 = vsyncpa %s11, 0
    %13 = vsyncpa [#allocation10], 0
    loop: start=0, step=1, limit=4
    $region2: #{tpu_custom_call.1} parent=1 // loop_pre_header
      _
    $region3: #{tpu_custom_call.1} parent=1 // loop_header
      %s15 = sphi 0, %s19
      %p16 = scmp.ge.s32.totalorder %s15, 4
      %s22 = sphi 0, %s34
      %s23 = sphi 0, %s30
      %s24 = sphi 0, %s22
      %s25 = sphi 0, %s23
      %s26 = sphi 0, %s24
      %s27 = sphi 0, %s25
      %s37 = sphi 0, %s39
      %s40 = sphi 0, %s37
      %s41 = sphi 0, %s40
      %s57 = sphi 0, %s41
      %s65 = sphi 0, %s67
      %s68 = sphi 0, %s65
      %s69 = sphi 0, %s68
      %s85 = sphi 0, %s69
      %s91 = sphi 0, %s93
      %s94 = sphi 0, %s91
      %s95 = sphi 0, %s94
      %s111 = sphi 0, %s95
    $region4: #{tpu_custom_call.1} parent=1 // loop_header_branch
      %18 = sbr.rel (%p16) target = $region8
    $region5: #{tpu_custom_call.1} parent=1 // loop_body
      %s20 = ssub.s32 %s15, 1
      %s21 = ssub.s32 %s15, 2
      %s28 = sadd.s32 1, %s23
      %p29 = scmp.ge.s32.totalorder %s28, 1
      %s30 = scalar_select %p29, 0, %s28
      %s31 = sadd.s32 1, %s22
      %s32 = scalar_select %p29, %s31, %s22
      %p33 = scmp.ge.s32.totalorder %s32, 2
      %s34 = scalar_select %p33, 0, %s32
      %s35 = ssub.s32 %s23, %s30
      %p36 = scmp.eq.s32.totalorder %s35, 0
      %s38 = sadd.s32 %s37, 1
      %s39 = scalar_select %p36, %s37, %s38
      %p42 = pneg %p36
      %p43 = scmp.eq.s32.totalorder %s15, 1
      %p44 = por %p42, %p43
      %p45 = scmp.ne.s32.totalorder %s37, %s40
      %p46 = scmp.eq.s32.totalorder %s15, 0
      %p47 = por %p45, %p46
      %p48 = scmp.ne.s32.totalorder %s37, %s40
      %p49 = scmp.eq.s32.totalorder %s20, 1
      %p50 = por %p48, %p49
      %p51 = scmp.ne.s32.totalorder %s40, %s41
      %p52 = scmp.eq.s32.totalorder %s20, 0
      %p53 = por %p51, %p52
      %p54 = scmp.ne.s32.totalorder %s40, %s41
      %p55 = scmp.eq.s32.totalorder %s21, 1
      %p56 = por %p54, %p55
      %p58 = scmp.ne.s32.totalorder %s41, %s57
      %p59 = scmp.eq.s32.totalorder %s21, 0
      %p60 = por %p58, %p59
      %s61 = ssub.s32 %s22, %s34
      %s62 = ssub.s32 %s23, %s30
      %s63 = sor.u32 %s61, %s62
      %p64 = scmp.eq.s32.totalorder %s63, 0
      %s66 = sadd.s32 %s65, 1
      %s67 = scalar_select %p64, %s65, %s66
      %p70 = pneg %p64
      %p71 = scmp.eq.s32.totalorder %s15, 1
      %p72 = por %p70, %p71
      %p73 = scmp.ne.s32.totalorder %s65, %s68
      %p74 = scmp.eq.s32.totalorder %s15, 0
      %p75 = por %p73, %p74
      %p76 = scmp.ne.s32.totalorder %s65, %s68
      %p77 = scmp.eq.s32.totalorder %s20, 1
      %p78 = por %p76, %p77
      %p79 = scmp.ne.s32.totalorder %s68, %s69
      %p80 = scmp.eq.s32.totalorder %s20, 0
      %p81 = por %p79, %p80
      %p82 = scmp.ne.s32.totalorder %s68, %s69
      %p83 = scmp.eq.s32.totalorder %s21, 1
      %p84 = por %p82, %p83
      %p86 = scmp.ne.s32.totalorder %s69, %s85
      %p87 = scmp.eq.s32.totalorder %s21, 0
      %p88 = por %p86, %p87
      %s89 = ssub.s32 %s23, %s30
      %p90 = scmp.eq.s32.totalorder %s89, 0
      %s92 = sadd.s32 %s91, 1
      %s93 = scalar_select %p90, %s91, %s92
      %p96 = pneg %p90
      %p97 = scmp.eq.s32.totalorder %s15, 1
      %p98 = por %p96, %p97
      %p99 = scmp.ne.s32.totalorder %s91, %s94
      %p100 = scmp.eq.s32.totalorder %s15, 0
      %p101 = por %p99, %p100
      %p102 = scmp.ne.s32.totalorder %s91, %s94
      %p103 = scmp.eq.s32.totalorder %s20, 1
      %p104 = por %p102, %p103
      %p105 = scmp.ne.s32.totalorder %s94, %s95
      %p106 = scmp.eq.s32.totalorder %s20, 0
      %p107 = por %p105, %p106
      %p108 = scmp.ne.s32.totalorder %s94, %s95
      %p109 = scmp.eq.s32.totalorder %s21, 1
      %p110 = por %p108, %p109
      %p112 = scmp.ne.s32.totalorder %s95, %s111
      %p113 = scmp.eq.s32.totalorder %s21, 0
      %p114 = por %p112, %p113
      %p115 = scmp.le.s32.totalorder 1, %s15
      %p116 = scmp.lt.s32.totalorder %s15, 3
      %p117 = pnand %p115, %p116
      %p118 = pneg %p117
      // Predicated region
      $region9: #{tpu_custom_call.1} parent=5 // pred_check
        _
      $region10: #{tpu_custom_call.1} parent=5 // pred_check_branch
        %120 = sbr.rel (%p117) target = $region12
      $region11: #{tpu_custom_call.1} parent=5 // pred_region
        %s121 = ssub.s32 %s15, 1
        // Predicated region
        $region13: #{tpu_custom_call.1} parent=11 // pred_check
          %p122 = pneg %p53
        $region14: #{tpu_custom_call.1} parent=11 // pred_check_branch
          %124 = sbr.rel (%p122) target = $region16
        $region15: #{tpu_custom_call.1} parent=11 // pred_region
          %s125 = smul.u32 16, %s25
          %127 = vsyncadd [#allocation6], 0
          %s128 = smul.addr %s125, 4
          %s129 = scalar_lea.hbm %s0, %s128
          %s130 = sshll.u32 %s129, 4
          %s131 = int_to_ptr.hbm [resolvable:$true] %s130
          %s132 = sshll.u32 [#allocation5], 4
          %s133 = int_to_ptr.vmem [resolvable:$true] %s132
          %138 = dma.hbm_to_vmem [thread:$0]  %s131, 1024, %s133, [#allocation6], 64, 64, 4
        $region16: #{tpu_custom_call.1} parent=11 // pred_fallthru
          _
      $region12: #{tpu_custom_call.1} parent=5 // pred_fallthru
        _
      %p139 = scmp.lt.s32.totalorder %s15, 2
      // Predicated region
      $region17: #{tpu_custom_call.1} parent=5 // pred_check
        %p140 = pneg %p139
      $region18: #{tpu_custom_call.1} parent=5 // pred_check_branch
        %142 = sbr.rel (%p140) target = $region20
      $region19: #{tpu_custom_call.1} parent=5 // pred_region
        _
      $region20: #{tpu_custom_call.1} parent=5 // pred_fallthru
        _
      %p143 = scmp.le.s32.totalorder 1, %s15
      %p144 = scmp.lt.s32.totalorder %s15, 3
      %p145 = pnand %p143, %p144
      %p146 = pneg %p145
      // Predicated region
      $region21: #{tpu_custom_call.1} parent=5 // pred_check
        _
      $region22: #{tpu_custom_call.1} parent=5 // pred_check_branch
        %148 = sbr.rel (%p145) target = $region24
      $region23: #{tpu_custom_call.1} parent=5 // pred_region
        %s149 = ssub.s32 %s15, 1
        // Predicated region
        $region25: #{tpu_custom_call.1} parent=23 // pred_check
          %p150 = pneg %p53
        $region26: #{tpu_custom_call.1} parent=23 // pred_check_branch
          %152 = sbr.rel (%p150) target = $region28
        $region27: #{tpu_custom_call.1} parent=23 // pred_region
          %154 = dma.done [#allocation6], 1024
        $region28: #{tpu_custom_call.1} parent=23 // pred_fallthru
          _
        %p155 = pneg %p53
        %p156 = pneg %p50
        %p157 = pneg %p81
        %p158 = pneg %p78
        %s159 = sand.u32 %s68, 1
        %s160 = scalar_lea.sflag [#allocation7], %s159
        %s161 = sand.u32 %s68, 1
        %s162 = smul.addr %s161, 128
        %s163 = scalar_lea.vmem [#allocation8], %s162
        %p164 = pneg %p107
        %p165 = pneg %p104
        %s166 = smul.u32 16, %s25
        %s167 = smul.u32 16, %s25
        %s168 = smul.u32 16, %s25
        %p169 = scmp.eq.s32.totalorder %s24, 0
        %p170 = scmp.eq.s32.totalorder %s25, 0
        %p171 = pnand %p169, %p170
        %p172 = pneg %p171
        // Predicated region
        $region29: #{tpu_custom_call.1} parent=23 // pred_check
          _
        $region30: #{tpu_custom_call.1} parent=23 // pred_check_branch
          %174 = sbr.rel (%p171) target = $region32
        $region31: #{tpu_custom_call.1} parent=23 // pred_region
          $region33: #{tpu_custom_call.1} parent=31
            #allocation11 [shape = 's32[1]{0}', space=sflag, size = 0x4, scoped, tag = 'scoped memory for tpu_custom_call.1']
            // Predicated region
            $region34: #{tpu_custom_call.1} parent=33 // pred_check
              _
            $region35: #{tpu_custom_call.1} parent=33 // pred_check_branch
              %176 = sbr.rel target = $region37
            $region36: #{tpu_custom_call.1} parent=33 // pred_region
              %177 = sst [smem:[#allocation14]] [#allocation13]
              %178 = sst [smem:[#allocation15]] [#allocation12]
            $region37: #{tpu_custom_call.1} parent=33 // pred_fallthru
              _
            %180 = shalt.err (0)
            %s182 = sshll.u32 %s1, 4
            %s183 = int_to_ptr.hbm [resolvable:$true] %s182
            %s184 = sshll.u32 [#allocation2], 4
            %s185 = int_to_ptr.vmem [resolvable:$true] %s184
            %187 = dma.hbm_to_vmem [thread:$0]  %s183, 2048, %s185, [#allocation11]
            %s188 = smul.u32 128, 1
            %s189 = sshll.u32 %s188, 4
            %190 = dma.done [#allocation11], %s189
          %v191 = vld [vmem:[#allocation2] sm:$0xff]
          %v192 = vld [vmem:[#allocation2 + $0x8] sm:$0xff]
          %v193 = vld [vmem:[#allocation2 + $0x10] sm:$0xff]
          %v194 = vld [vmem:[#allocation2 + $0x18] sm:$0xff]
          %v195 = vld [vmem:[#allocation2 + $0x20] sm:$0xff]
          %v196 = vld [vmem:[#allocation2 + $0x28] sm:$0xff]
          %v197 = vld [vmem:[#allocation2 + $0x30] sm:$0xff]
          %v198 = vld [vmem:[#allocation2 + $0x38] sm:$0xff]
          %v199 = vld [vmem:[#allocation2 + $0x40] sm:$0xff]
          %v200 = vld [vmem:[#allocation2 + $0x48] sm:$0xff]
          %v201 = vld [vmem:[#allocation2 + $0x50] sm:$0xff]
          %v202 = vld [vmem:[#allocation2 + $0x58] sm:$0xff]
          %v203 = vld [vmem:[#allocation2 + $0x60] sm:$0xff]
          %v204 = vld [vmem:[#allocation2 + $0x68] sm:$0xff]
          %v205 = vld [vmem:[#allocation2 + $0x70] sm:$0xff]
          %v206 = vld [vmem:[#allocation2 + $0x78] sm:$0xff]
          %207 = vst [vmem:[#allocation4] sm:$0xff] %v191
          %208 = vst [vmem:[#allocation4 + $0x8] sm:$0xff] %v192
          %209 = vst [vmem:[#allocation4 + $0x10] sm:$0xff] %v193
          %210 = vst [vmem:[#allocation4 + $0x18] sm:$0xff] %v194
          %211 = vst [vmem:[#allocation4 + $0x20] sm:$0xff] %v195
          %212 = vst [vmem:[#allocation4 + $0x28] sm:$0xff] %v196
          %213 = vst [vmem:[#allocation4 + $0x30] sm:$0xff] %v197
          %214 = vst [vmem:[#allocation4 + $0x38] sm:$0xff] %v198
          %215 = vst [vmem:[#allocation4 + $0x40] sm:$0xff] %v199
          %216 = vst [vmem:[#allocation4 + $0x48] sm:$0xff] %v200
          %217 = vst [vmem:[#allocation4 + $0x50] sm:$0xff] %v201
          %218 = vst [vmem:[#allocation4 + $0x58] sm:$0xff] %v202
          %219 = vst [vmem:[#allocation4 + $0x60] sm:$0xff] %v203
          %220 = vst [vmem:[#allocation4 + $0x68] sm:$0xff] %v204
          %221 = vst [vmem:[#allocation4 + $0x70] sm:$0xff] %v205
          %222 = vst [vmem:[#allocation4 + $0x78] sm:$0xff] %v206
        $region32: #{tpu_custom_call.1} parent=23 // pred_fallthru
          _
        %s223 = smul.u32 %s25, 128
        %v224 = vld [vmem:[#allocation5] sm:$0xf]
        %v225 = vld [vmem:[#allocation5 + $0x4] sm:$0xf]
        %v226 = vld [vmem:[#allocation5 + $0x8] sm:$0xf]
        %v227 = vld [vmem:[#allocation5 + $0xc] sm:$0xf]
        %v228 = vld [vmem:[#allocation5 + $0x10] sm:$0xf]
        %v229 = vld [vmem:[#allocation5 + $0x14] sm:$0xf]
        %v230 = vld [vmem:[#allocation5 + $0x18] sm:$0xf]
        %v231 = vld [vmem:[#allocation5 + $0x1c] sm:$0xf]
        %v232 = vld [vmem:[#allocation5 + $0x20] sm:$0xf]
        %v233 = vld [vmem:[#allocation5 + $0x24] sm:$0xf]
        %v234 = vld [vmem:[#allocation5 + $0x28] sm:$0xf]
        %v235 = vld [vmem:[#allocation5 + $0x2c] sm:$0xf]
        %v236 = vld [vmem:[#allocation5 + $0x30] sm:$0xf]
        %v237 = vld [vmem:[#allocation5 + $0x34] sm:$0xf]
        %v238 = vld [vmem:[#allocation5 + $0x38] sm:$0xf]
        %v239 = vld [vmem:[#allocation5 + $0x3c] sm:$0xf]
        %v240 = vld [vmem:[#allocation2] sm:$0xff]
        %v241 = vld [vmem:[#allocation2 + $0x8] sm:$0xff]
        %v242 = vld [vmem:[#allocation2 + $0x10] sm:$0xff]
        %v243 = vld [vmem:[#allocation2 + $0x18] sm:$0xff]
        %v244 = vld [vmem:[#allocation2 + $0x20] sm:$0xff]
        %v245 = vld [vmem:[#allocation2 + $0x28] sm:$0xff]
        %v246 = vld [vmem:[#allocation2 + $0x30] sm:$0xff]
        %v247 = vld [vmem:[#allocation2 + $0x38] sm:$0xff]
        %v248 = vld [vmem:[#allocation2 + $0x40] sm:$0xff]
        %v249 = vld [vmem:[#allocation2 + $0x48] sm:$0xff]
        %v250 = vld [vmem:[#allocation2 + $0x50] sm:$0xff]
        %v251 = vld [vmem:[#allocation2 + $0x58] sm:$0xff]
        %v252 = vld [vmem:[#allocation2 + $0x60] sm:$0xff]
        %v253 = vld [vmem:[#allocation2 + $0x68] sm:$0xff]
        %v254 = vld [vmem:[#allocation2 + $0x70] sm:$0xff]
        %v255 = vld [vmem:[#allocation2 + $0x78] sm:$0xff]
        %v256 = vpack.c.bf16 %v241, %v240
        %v257 = vpack.c.bf16 %v243, %v242
        %v258 = vpack.c.bf16 %v245, %v244
        %v259 = vpack.c.bf16 %v247, %v246
        %v260 = vpack.c.bf16 %v249, %v248
        %v261 = vpack.c.bf16 %v251, %v250
        %v262 = vpack.c.bf16 %v253, %v252
        %v263 = vpack.c.bf16 %v255, %v254
        %v280 = vunpack.c.l.b16 %v224
        %v281 = vunpack.c.l.b16 %v225
        %v282 = vunpack.c.l.b16 %v226
        %v283 = vunpack.c.l.b16 %v227
        %v284 = vunpack.c.l.b16 %v228
        %v285 = vunpack.c.l.b16 %v229
        %v286 = vunpack.c.l.b16 %v230
        %v287 = vunpack.c.l.b16 %v231
        %v288 = vunpack.c.l.b16 %v232
        %v289 = vunpack.c.l.b16 %v233
        %v290 = vunpack.c.l.b16 %v234
        %v291 = vunpack.c.l.b16 %v235
        %v292 = vunpack.c.l.b16 %v236
        %v293 = vunpack.c.l.b16 %v237
        %v294 = vunpack.c.l.b16 %v238
        %v295 = vunpack.c.l.b16 %v239
        %v296 = vpack.c.b16 %v281, %v280
        %v297 = vpack.c.b16 %v283, %v282
        %v298 = vpack.c.b16 %v285, %v284
        %v299 = vpack.c.b16 %v287, %v286
        %v300 = vpack.c.b16 %v289, %v288
        %v301 = vpack.c.b16 %v291, %v290
        %v302 = vpack.c.b16 %v293, %v292
        %v303 = vpack.c.b16 %v295, %v294
        %312 = vmatpush.bf16.msra.mxu0 %v263
        %313 = vmatpush.bf16.msra.mxu0 %v262
        %314 = vmatpush.bf16.msra.mxu0 %v261
        %315 = vmatpush.bf16.msra.mxu0 %v260
        %316 = vmatpush.bf16.msra.mxu0 %v259
        %317 = vmatpush.bf16.msra.mxu0 %v258
        %318 = vmatpush.bf16.msra.mxu0 %v257
        %319 = vmatpush.bf16.msra.mxu0 %v256
        %320 = vmatmul.bf16.gmra.mxu0 %v296
        %v321 = vpop.f32.mrf.mxu0
        %v322 = vadd.f32 0.0, %v321
        %v323 = vpop.f32.mrf.mxu0
        %v324 = vadd.f32 0.0, %v323
        %325 = vmatmul.bf16.gmra.mxu0 %v297
        %v326 = vpop.f32.mrf.mxu0
        %v327 = vadd.f32 0.0, %v326
        %v328 = vpop.f32.mrf.mxu0
        %v329 = vadd.f32 0.0, %v328
        %330 = vmatmul.bf16.gmra.mxu0 %v298
        %v331 = vpop.f32.mrf.mxu0
        %v332 = vadd.f32 0.0, %v331
        %v333 = vpop.f32.mrf.mxu0
        %v334 = vadd.f32 0.0, %v333
        %335 = vmatmul.bf16.gmra.mxu0 %v299
        %v336 = vpop.f32.mrf.mxu0
        %v337 = vadd.f32 0.0, %v336
        %v338 = vpop.f32.mrf.mxu0
        %v339 = vadd.f32 0.0, %v338
        %340 = vmatmul.bf16.gmra.mxu0 %v300
        %v341 = vpop.f32.mrf.mxu0
        %v342 = vadd.f32 0.0, %v341
        %v343 = vpop.f32.mrf.mxu0
        %v344 = vadd.f32 0.0, %v343
        %345 = vmatmul.bf16.gmra.mxu0 %v301
        %v346 = vpop.f32.mrf.mxu0
        %v347 = vadd.f32 0.0, %v346
        %v348 = vpop.f32.mrf.mxu0
        %v349 = vadd.f32 0.0, %v348
        %350 = vmatmul.bf16.gmra.mxu0 %v302
        %v351 = vpop.f32.mrf.mxu0
        %v352 = vadd.f32 0.0, %v351
        %v353 = vpop.f32.mrf.mxu0
        %v354 = vadd.f32 0.0, %v353
        %355 = vmatmul.bf16.gmra.mxu0 %v303
        %v356 = vpop.f32.mrf.mxu0
        %v357 = vadd.f32 0.0, %v356
        %v358 = vpop.f32.mrf.mxu0
        %v359 = vadd.f32 0.0, %v358
        %360 = vdwg.mxu0
        %s361 = scalar_lea.vmem [#allocation3], %s223
        %362 = vst [vmem:[%s361] sm:$0xff] %v322
        %363 = vst [vmem:[%s361 + $0x8] sm:$0xff] %v324
        %364 = vst [vmem:[%s361 + $0x10] sm:$0xff] %v327
        %365 = vst [vmem:[%s361 + $0x18] sm:$0xff] %v329
        %366 = vst [vmem:[%s361 + $0x20] sm:$0xff] %v332
        %367 = vst [vmem:[%s361 + $0x28] sm:$0xff] %v334
        %368 = vst [vmem:[%s361 + $0x30] sm:$0xff] %v337
        %369 = vst [vmem:[%s361 + $0x38] sm:$0xff] %v339
        %370 = vst [vmem:[%s361 + $0x40] sm:$0xff] %v342
        %371 = vst [vmem:[%s361 + $0x48] sm:$0xff] %v344
        %372 = vst [vmem:[%s361 + $0x50] sm:$0xff] %v347
        %373 = vst [vmem:[%s361 + $0x58] sm:$0xff] %v349
        %374 = vst [vmem:[%s361 + $0x60] sm:$0xff] %v352
        %375 = vst [vmem:[%s361 + $0x68] sm:$0xff] %v354
        %376 = vst [vmem:[%s361 + $0x70] sm:$0xff] %v357
        %377 = vst [vmem:[%s361 + $0x78] sm:$0xff] %v359
        %378 = vst [vmem:[%s163] sm:$0xff] %v322
        %379 = vst [vmem:[%s163 + $0x8] sm:$0xff] %v324
        %380 = vst [vmem:[%s163 + $0x10] sm:$0xff] %v327
        %381 = vst [vmem:[%s163 + $0x18] sm:$0xff] %v329
        %382 = vst [vmem:[%s163 + $0x20] sm:$0xff] %v332
        %383 = vst [vmem:[%s163 + $0x28] sm:$0xff] %v334
        %384 = vst [vmem:[%s163 + $0x30] sm:$0xff] %v337
        %385 = vst [vmem:[%s163 + $0x38] sm:$0xff] %v339
        %386 = vst [vmem:[%s163 + $0x40] sm:$0xff] %v342
        %387 = vst [vmem:[%s163 + $0x48] sm:$0xff] %v344
        %388 = vst [vmem:[%s163 + $0x50] sm:$0xff] %v347
        %389 = vst [vmem:[%s163 + $0x58] sm:$0xff] %v349
        %390 = vst [vmem:[%s163 + $0x60] sm:$0xff] %v352
        %391 = vst [vmem:[%s163 + $0x68] sm:$0xff] %v354
        %392 = vst [vmem:[%s163 + $0x70] sm:$0xff] %v357
        %393 = vst [vmem:[%s163 + $0x78] sm:$0xff] %v359
        %p394 = scmp.lt.s32.totalorder %s24, 2
        // Predicated region
        $region38: #{tpu_custom_call.1} parent=23 // pred_check
          %p395 = pneg %p394
        $region39: #{tpu_custom_call.1} parent=23 // pred_check_branch
          %397 = sbr.rel (%p395) target = $region41
        $region40: #{tpu_custom_call.1} parent=23 // pred_region
          %s398 = scalar_lea.vmem [#allocation4], %s223
          %v399 = vld [vmem:[%s398] sm:$0xff]
          %v400 = vld [vmem:[%s398 + $0x8] sm:$0xff]
          %v401 = vld [vmem:[%s398 + $0x10] sm:$0xff]
          %v402 = vld [vmem:[%s398 + $0x18] sm:$0xff]
          %v403 = vld [vmem:[%s398 + $0x20] sm:$0xff]
          %v404 = vld [vmem:[%s398 + $0x28] sm:$0xff]
          %v405 = vld [vmem:[%s398 + $0x30] sm:$0xff]
          %v406 = vld [vmem:[%s398 + $0x38] sm:$0xff]
          %v407 = vld [vmem:[%s398 + $0x40] sm:$0xff]
          %v408 = vld [vmem:[%s398 + $0x48] sm:$0xff]
          %v409 = vld [vmem:[%s398 + $0x50] sm:$0xff]
          %v410 = vld [vmem:[%s398 + $0x58] sm:$0xff]
          %v411 = vld [vmem:[%s398 + $0x60] sm:$0xff]
          %v412 = vld [vmem:[%s398 + $0x68] sm:$0xff]
          %v413 = vld [vmem:[%s398 + $0x70] sm:$0xff]
          %v414 = vld [vmem:[%s398 + $0x78] sm:$0xff]
          %v415 = vadd.f32 %v399, %v322
          %v416 = vadd.f32 %v400, %v324
          %v417 = vadd.f32 %v401, %v327
          %v418 = vadd.f32 %v402, %v329
          %v419 = vadd.f32 %v403, %v332
          %v420 = vadd.f32 %v404, %v334
          %v421 = vadd.f32 %v405, %v337
          %v422 = vadd.f32 %v406, %v339
          %v423 = vadd.f32 %v407, %v342
          %v424 = vadd.f32 %v408, %v344
          %v425 = vadd.f32 %v409, %v347
          %v426 = vadd.f32 %v410, %v349
          %v427 = vadd.f32 %v411, %v352
          %v428 = vadd.f32 %v412, %v354
          %v429 = vadd.f32 %v413, %v357
          %v430 = vadd.f32 %v414, %v359
          %431 = vst [vmem:[%s398] sm:$0xff] %v415
          %432 = vst [vmem:[%s398 + $0x8] sm:$0xff] %v416
          %433 = vst [vmem:[%s398 + $0x10] sm:$0xff] %v417
          %434 = vst [vmem:[%s398 + $0x18] sm:$0xff] %v418
          %435 = vst [vmem:[%s398 + $0x20] sm:$0xff] %v419
          %436 = vst [vmem:[%s398 + $0x28] sm:$0xff] %v420
          %437 = vst [vmem:[%s398 + $0x30] sm:$0xff] %v421
          %438 = vst [vmem:[%s398 + $0x38] sm:$0xff] %v422
          %439 = vst [vmem:[%s398 + $0x40] sm:$0xff] %v423
          %440 = vst [vmem:[%s398 + $0x48] sm:$0xff] %v424
          %441 = vst [vmem:[%s398 + $0x50] sm:$0xff] %v425
          %442 = vst [vmem:[%s398 + $0x58] sm:$0xff] %v426
          %443 = vst [vmem:[%s398 + $0x60] sm:$0xff] %v427
          %444 = vst [vmem:[%s398 + $0x68] sm:$0xff] %v428
          %445 = vst [vmem:[%s398 + $0x70] sm:$0xff] %v429
          %446 = vst [vmem:[%s398 + $0x78] sm:$0xff] %v430
        $region41: #{tpu_custom_call.1} parent=23 // pred_fallthru
          _
        %s447 = scalar_lea.vmem [#allocation4], %s223
        %v448 = vld [vmem:[%s447] sm:$0xff]
        %v449 = vld [vmem:[%s447 + $0x8] sm:$0xff]
        %v450 = vld [vmem:[%s447 + $0x10] sm:$0xff]
        %v451 = vld [vmem:[%s447 + $0x18] sm:$0xff]
        %v452 = vld [vmem:[%s447 + $0x20] sm:$0xff]
        %v453 = vld [vmem:[%s447 + $0x28] sm:$0xff]
        %v454 = vld [vmem:[%s447 + $0x30] sm:$0xff]
        %v455 = vld [vmem:[%s447 + $0x38] sm:$0xff]
        %v456 = vld [vmem:[%s447 + $0x40] sm:$0xff]
        %v457 = vld [vmem:[%s447 + $0x48] sm:$0xff]
        %v458 = vld [vmem:[%s447 + $0x50] sm:$0xff]
        %v459 = vld [vmem:[%s447 + $0x58] sm:$0xff]
        %v460 = vld [vmem:[%s447 + $0x60] sm:$0xff]
        %v461 = vld [vmem:[%s447 + $0x68] sm:$0xff]
        %v462 = vld [vmem:[%s447 + $0x70] sm:$0xff]
        %v463 = vld [vmem:[%s447 + $0x78] sm:$0xff]
        %v464 = vmul.f32 %v448, 0.33333334
        %v465 = vmul.f32 %v449, 0.33333334
        %v466 = vmul.f32 %v450, 0.33333334
        %v467 = vmul.f32 %v451, 0.33333334
        %v468 = vmul.f32 %v452, 0.33333334
        %v469 = vmul.f32 %v453, 0.33333334
        %v470 = vmul.f32 %v454, 0.33333334
        %v471 = vmul.f32 %v455, 0.33333334
        %v472 = vmul.f32 %v456, 0.33333334
        %v473 = vmul.f32 %v457, 0.33333334
        %v474 = vmul.f32 %v458, 0.33333334
        %v475 = vmul.f32 %v459, 0.33333334
        %v476 = vmul.f32 %v460, 0.33333334
        %v477 = vmul.f32 %v461, 0.33333334
        %v478 = vmul.f32 %v462, 0.33333334
        %v479 = vmul.f32 %v463, 0.33333334
        %480 = vst [vmem:[#allocation9] sm:$0xff] %v464
        %481 = vst [vmem:[#allocation9 + $0x8] sm:$0xff] %v465
        %482 = vst [vmem:[#allocation9 + $0x10] sm:$0xff] %v466
        %483 = vst [vmem:[#allocation9 + $0x18] sm:$0xff] %v467
        %484 = vst [vmem:[#allocation9 + $0x20] sm:$0xff] %v468
        %485 = vst [vmem:[#allocation9 + $0x28] sm:$0xff] %v469
        %486 = vst [vmem:[#allocation9 + $0x30] sm:$0xff] %v470
        %487 = vst [vmem:[#allocation9 + $0x38] sm:$0xff] %v471
        %488 = vst [vmem:[#allocation9 + $0x40] sm:$0xff] %v472
        %489 = vst [vmem:[#allocation9 + $0x48] sm:$0xff] %v473
        %490 = vst [vmem:[#allocation9 + $0x50] sm:$0xff] %v474
        %491 = vst [vmem:[#allocation9 + $0x58] sm:$0xff] %v475
        %492 = vst [vmem:[#allocation9 + $0x60] sm:$0xff] %v476
        %493 = vst [vmem:[#allocation9 + $0x68] sm:$0xff] %v477
        %494 = vst [vmem:[#allocation9 + $0x70] sm:$0xff] %v478
        %495 = vst [vmem:[#allocation9 + $0x78] sm:$0xff] %v479
        %p496 = scmp.lt.s32.totalorder %s24, 1
        %p497 = pnand %p170, %p496
        %p498 = pneg %p497
        // Predicated region
        $region42: #{tpu_custom_call.1} parent=23 // pred_check
          _
        $region43: #{tpu_custom_call.1} parent=23 // pred_check_branch
          %500 = sbr.rel (%p497) target = $region45
        $region44: #{tpu_custom_call.1} parent=23 // pred_region
          %v501 = vld [vmem:[#allocation3] sm:$0xff]
          %v502 = vld [vmem:[#allocation3 + $0x8] sm:$0xff]
          %v503 = vld [vmem:[#allocation3 + $0x10] sm:$0xff]
          %v504 = vld [vmem:[#allocation3 + $0x18] sm:$0xff]
          %v505 = vld [vmem:[#allocation3 + $0x20] sm:$0xff]
          %v506 = vld [vmem:[#allocation3 + $0x28] sm:$0xff]
          %v507 = vld [vmem:[#allocation3 + $0x30] sm:$0xff]
          %v508 = vld [vmem:[#allocation3 + $0x38] sm:$0xff]
          %v509 = vld [vmem:[#allocation3 + $0x40] sm:$0xff]
          %v510 = vld [vmem:[#allocation3 + $0x48] sm:$0xff]
          %v511 = vld [vmem:[#allocation3 + $0x50] sm:$0xff]
          %v512 = vld [vmem:[#allocation3 + $0x58] sm:$0xff]
          %v513 = vld [vmem:[#allocation3 + $0x60] sm:$0xff]
          %v514 = vld [vmem:[#allocation3 + $0x68] sm:$0xff]
          %v515 = vld [vmem:[#allocation3 + $0x70] sm:$0xff]
          %v516 = vld [vmem:[#allocation3 + $0x78] sm:$0xff]
          %517 = vst [vmem:[#allocation2] sm:$0xff] %v501
          %518 = vst [vmem:[#allocation2 + $0x8] sm:$0xff] %v502
          %519 = vst [vmem:[#allocation2 + $0x10] sm:$0xff] %v503
          %520 = vst [vmem:[#allocation2 + $0x18] sm:$0xff] %v504
          %521 = vst [vmem:[#allocation2 + $0x20] sm:$0xff] %v505
          %522 = vst [vmem:[#allocation2 + $0x28] sm:$0xff] %v506
          %523 = vst [vmem:[#allocation2 + $0x30] sm:$0xff] %v507
          %524 = vst [vmem:[#allocation2 + $0x38] sm:$0xff] %v508
          %525 = vst [vmem:[#allocation2 + $0x40] sm:$0xff] %v509
          %526 = vst [vmem:[#allocation2 + $0x48] sm:$0xff] %v510
          %527 = vst [vmem:[#allocation2 + $0x50] sm:$0xff] %v511
          %528 = vst [vmem:[#allocation2 + $0x58] sm:$0xff] %v512
          %529 = vst [vmem:[#allocation2 + $0x60] sm:$0xff] %v513
          %530 = vst [vmem:[#allocation2 + $0x68] sm:$0xff] %v514
          %531 = vst [vmem:[#allocation2 + $0x70] sm:$0xff] %v515
          %532 = vst [vmem:[#allocation2 + $0x78] sm:$0xff] %v516
        $region45: #{tpu_custom_call.1} parent=23 // pred_fallthru
          _
        %s533 = sand.u32 %s68, 1
        %s534 = scalar_lea.sflag [#allocation7], %s533
        %s535 = sand.u32 %s68, 1
        %s536 = smul.addr %s535, 128
        %s537 = scalar_lea.vmem [#allocation8], %s536
        // Predicated region
        $region46: #{tpu_custom_call.1} parent=23 // pred_check
          %p538 = pneg %p78
        $region47: #{tpu_custom_call.1} parent=23 // pred_check_branch
          %540 = sbr.rel (%p538) target = $region49
        $region48: #{tpu_custom_call.1} parent=23 // pred_region
          %s541 = smul.u32 16, %s25
          %543 = vsyncadd %s534, 0
          %s544 = smul.addr %s24, 16
          %s545 = sadd.s32 %s541, %s544
          %s546 = smul.addr %s545, 8
          %s547 = scalar_lea.hbm %s2, %s546
          %s548 = sshll.u32 %s537, 4
          %s549 = int_to_ptr.vmem [resolvable:$true] %s548
          %s550 = sshll.u32 %s547, 4
          %s551 = int_to_ptr.hbm [resolvable:$true] %s550
          %556 = dma.vmem_to_hbm [thread:$0]  %s549, 2048, %s551, %s534, 128, 128, 8
        $region49: #{tpu_custom_call.1} parent=23 // pred_fallthru
          _
        // Predicated region
        $region50: #{tpu_custom_call.1} parent=23 // pred_check
          %p557 = pneg %p104
        $region51: #{tpu_custom_call.1} parent=23 // pred_check_branch
          %559 = sbr.rel (%p557) target = $region53
        $region52: #{tpu_custom_call.1} parent=23 // pred_region
          %s560 = smul.u32 16, %s25
          %562 = vsyncadd [#allocation10], 0
          %s563 = smul.addr %s560, 8
          %s564 = scalar_lea.hbm %s3, %s563
          %s565 = sshll.u32 [#allocation9], 4
          %s566 = int_to_ptr.vmem [resolvable:$true] %s565
          %s567 = sshll.u32 %s564, 4
          %s568 = int_to_ptr.hbm [resolvable:$true] %s567
          %573 = dma.vmem_to_hbm [thread:$0]  %s566, 2048, %s568, [#allocation10], 128, 128, 8
        $region53: #{tpu_custom_call.1} parent=23 // pred_fallthru
          _
        // Predicated region
        $region54: #{tpu_custom_call.1} parent=23 // pred_check
          %p574 = pneg %p104
        $region55: #{tpu_custom_call.1} parent=23 // pred_check_branch
          %576 = sbr.rel (%p574) target = $region57
        $region56: #{tpu_custom_call.1} parent=23 // pred_region
          %578 = dma.done [#allocation10], 2048
        $region57: #{tpu_custom_call.1} parent=23 // pred_fallthru
          _
      $region24: #{tpu_custom_call.1} parent=5 // pred_fallthru
        _
      %p579 = scmp.le.s32.totalorder 2, %s15
      // Predicated region
      $region58: #{tpu_custom_call.1} parent=5 // pred_check
        %p580 = pneg %p579
      $region59: #{tpu_custom_call.1} parent=5 // pred_check_branch
        %582 = sbr.rel (%p580) target = $region61
      $region60: #{tpu_custom_call.1} parent=5 // pred_region
        %s583 = ssub.s32 %s15, 2
        // Predicated region
        $region62: #{tpu_custom_call.1} parent=60 // pred_check
          %p584 = pneg %p84
        $region63: #{tpu_custom_call.1} parent=60 // pred_check_branch
          %586 = sbr.rel (%p584) target = $region65
        $region64: #{tpu_custom_call.1} parent=60 // pred_region
          %s587 = sand.u32 %s69, 1
          %s588 = scalar_lea.sflag [#allocation7], %s587
          %s589 = sand.u32 %s69, 1
          %s590 = smul.addr %s589, 128
          %s591 = scalar_lea.vmem [#allocation8], %s590
          %593 = dma.done %s588, 2048
        $region65: #{tpu_custom_call.1} parent=60 // pred_fallthru
          _
      $region61: #{tpu_custom_call.1} parent=5 // pred_fallthru
        _
    $region6: #{tpu_custom_call.1} parent=1 // loop_footer
      %s19 = sadd.s32 1, %s15
    $region7: #{tpu_custom_call.1} parent=1 // loop_footer_branch
      %14 = sbr.rel target = $region3
    $region8: #{tpu_custom_call.1} parent=1 // loop_exit
      _
    %594 = vsyncpa [#allocation6], 1
    %s595 = scalar_lea.sflag [#allocation6], 1
    %596 = vsyncpa %s595, 1
    %597 = vsyncpa [#allocation7], 1
    %s598 = scalar_lea.sflag [#allocation7], 1
    %599 = vsyncpa %s598, 1
    %600 = vsyncpa [#allocation10], 1

</llo_original>
